<compile_context>
chip_gen: v7x
topology: tpu7x:2x2x1
jax: 0.10.0
libtpu: 0.0.40
codegen_flags: <defaults>
</compile_context>

<pallas_src>
import jax
import jax.numpy as jnp
from jax.experimental import pallas as pl
from jax.experimental.pallas import tpu as pltpu


def _round_up(v, m):
    return ((v + m - 1) // m) * m


def simple_nn_kernel(x_ref, wt_ref, b_ref, o_ref):
    # x_ref: (TILE_B, 300) [stream dtype], wt_ref: (300, 4) [pre-transposed,
    # stream dtype], b_ref: (1, 4), o_ref: (TILE_B, 4) [output dtype].
    x = x_ref[...]
    wt = wt_ref[...]
    b = b_ref[...].astype(jnp.float32)

    # Linear: x @ W^T + b, W^T materialized once outside the kernel.
    # f32 accumulation on the MXU regardless of the streamed dtype.
    logits = jnp.dot(x, wt, preferred_element_type=jnp.float32) + b

    # Softmax along dim=1 (last axis), numerically stabilized, all in f32.
    m = jnp.max(logits, axis=-1, keepdims=True)
    e = jnp.exp(logits - m)
    denom = jnp.sum(e, axis=-1, keepdims=True)
    # Exact divide: rows sum to 1 within f32 rounding. The VPU divide is fully
    # hidden under the per-tile HBM DMA, so there is no reason to approximate.
    o_ref[...] = (e / denom).astype(o_ref.dtype)


def simple_nn_forward(x, weight, bias, *, tile_b=None, stream_dtype=jnp.bfloat16):
    """x: (B, 300); weight: (4, 300) [PyTorch layout]; bias: (4,).

    stream_dtype: dtype x and W^T are streamed/held in VMEM as (bf16 default);
                  None keeps x.dtype. Output is always x.dtype.
    """
    B, in_features = x.shape
    out_features = weight.shape[0]
    out_dtype = x.dtype

    if stream_dtype is None:
        stream_dtype = x.dtype
    stream_dtype = jnp.dtype(stream_dtype)

    # One-time layout / dtype prep outside the hot path.
    x_s = x.astype(stream_dtype)
    wt = jnp.transpose(weight).astype(stream_dtype)     # (in_features, out_features)
    bias2d = bias.reshape(1, out_features).astype(jnp.float32)

    # Sublane alignment: 16 rows for 16-bit streamed dtypes, 8 for 32-bit.
    sublane = 16 if stream_dtype.itemsize == 2 else 8
    MAX_TILE_B = 8192  # safe on every generation incl. v7x's 64 MiB VMEM

    if tile_b is None:
        # Aim for >= 2 grid steps so "parallel" uses both v7x TensorCores,
        # while keeping tiles big enough to amortize the ~0.35 us/step overhead.
        tile_b = min(MAX_TILE_B, _round_up(pl.cdiv(B, 2), sublane))
    tile_b = max(int(tile_b), 1)

    grid = (pl.cdiv(B, tile_b),)

    # --- Explicit VMEM budget (per grid step, double-buffered) -------------
    # x block:   tile_b x 300 lanes padded to 384  -> tile_b * 384 * itemsize
    # out block: tile_b x   4 lanes padded to 128  -> tile_b * 128 * out_itemsize
    # resident:  W^T (300x4 -> ~304x128) + bias (tiny)
    lanes_x = _round_up(in_features, 128)
    lanes_o = _round_up(out_features, 128)
    x_bytes = stream_dtype.itemsize
    o_bytes = jnp.dtype(out_dtype).itemsize
    per_step = 2 * tile_b * (lanes_x * x_bytes + lanes_o * o_bytes)   # 2x = double buffer
    resident = (_round_up(in_features, 8) * lanes_o * x_bytes         # W^T
                + 8 * lanes_o * 4)                                    # bias
    vmem_limit = int(max(per_step + resident + (2 << 20), 32 << 20))  # margin; >= default

    cost = pl.CostEstimate(
        flops=2 * B * in_features * out_features,
        transcendentals=B * out_features,                              # exp per logit
        bytes_accessed=(B * in_features * x_bytes                      # x read
                        + in_features * out_features * x_bytes         # W read
                        + out_features * 4                             # bias read
                        + B * out_features * o_bytes),                 # out write
    )

    return pl.pallas_call(
        simple_nn_kernel,
        out_shape=jax.ShapeDtypeStruct((B, out_features), out_dtype),
        grid_spec=pltpu.PrefetchScalarGridSpec(
            num_scalar_prefetch=0,
            grid=grid,
            in_specs=[
                # x: streamed batch tiles (full feature dim per tile).
                pl.BlockSpec((tile_b, in_features), lambda i: (i, 0)),
                # W^T and bias: tiny, resident across all grid steps.
                pl.BlockSpec((in_features, out_features), lambda i: (0, 0)),
                pl.BlockSpec((1, out_features), lambda i: (0, 0)),
            ],
            out_specs=pl.BlockSpec((tile_b, out_features), lambda i: (i, 0)),
        ),
        compiler_params=pltpu.CompilerParams(
            dimension_semantics=("parallel",),   # shard batch tiles across TCs (v7x)
            vmem_limit_bytes=vmem_limit,
        ),
        cost_estimate=cost,
    )(x_s, wt, bias2d)


if __name__ == "__main__":
    key = jax.random.PRNGKey(0)
    k_x, k_w, k_b = jax.random.split(key, 3)

    batch = 70          # deliberately not tile-aligned to exercise padding
    in_features = 300
    out_features = 4

    # Deterministic synthetic parameters (PyTorch-like uniform init scale).
    bound = 1.0 / (in_features ** 0.5)
    weight = jax.random.uniform(
        k_w, (out_features, in_features), jnp.float32, -bound, bound
    )
    bias = jax.random.uniform(k_b, (out_features,), jnp.float32, -bound, bound)
    x = jax.random.normal(k_x, (batch, in_features), jnp.float32)

    # Reference in plain JAX (f32).
    ref = jax.nn.softmax(x @ weight.T + bias, axis=1)

    # Run 1: default path -> bf16 streamed x/W, auto tile (2 grid steps here).
    out_bf16 = jax.block_until_ready(simple_nn_forward(x, weight, bias))
    # Run 2: f32 streamed, small explicit tile -> multi-step pipelined grid
    # with a partial last tile.
    out_f32 = jax.block_until_ready(
        simple_nn_forward(x, weight, bias, tile_b=16, stream_dtype=None)
    )

    assert out_bf16.shape == (batch, out_features)
    assert out_f32.shape == (batch, out_features)

    # f32 path matches the reference tightly.
    assert jnp.allclose(out_f32, ref, atol=1e-5, rtol=1e-5)
    # bf16-streamed path: bf16 inputs lose ~3 decimal digits in the logits.
    assert jnp.allclose(out_bf16, ref, atol=1e-2, rtol=1e-2)

    # Rows of a softmax must sum to 1 (exact divide -> tight tolerance).
    for out in (out_bf16, out_f32):
        assert jnp.allclose(jnp.sum(out, axis=1), 1.0, atol=1e-5)

    print("KERNEL_OK")
</pallas_src>

<mosaic_0001>
module attributes {stable_mosaic.version = 11 : i64} {
  func.func @simple_nn_kernel(%arg0: i32, %arg1: memref<48x300xbf16, #tpu.memory_space<vmem>>, %arg2: memref<300x4xbf16, #tpu.memory_space<vmem>>, %arg3: memref<1x4xf32, #tpu.memory_space<vmem>>, %arg4: memref<48x4xf32, #tpu.memory_space<vmem>>) attributes {dimension_semantics = [#tpu.dimension_semantics<parallel>], iteration_bounds = array<i64: 2>, scalar_prefetch = 0 : i64, scratch_operands = 0 : i64, tpu.core_type = #tpu.core_type<tc>, window_params = [{transform_indices = @transform_0, window_bounds = array<i64: 48, 300>}, {pipeline_mode = #tpu.pipeline_mode<synchronous>, transform_indices = @transform_1, window_bounds = array<i64: 300, 4>}, {pipeline_mode = #tpu.pipeline_mode<synchronous>, transform_indices = @transform_2, window_bounds = array<i64: 1, 4>}, {transform_indices = @transform_3, window_bounds = array<i64: 48, 4>}]} {
    %c0 = arith.constant 0 : index
    %c0_0 = arith.constant 0 : index
    %0 = vector.load %arg1[%c0, %c0_0] : memref<48x300xbf16, #tpu.memory_space<vmem>>, vector<48x300xbf16>
    %c0_1 = arith.constant 0 : index
    %c0_2 = arith.constant 0 : index
    %1 = vector.load %arg2[%c0_1, %c0_2] : memref<300x4xbf16, #tpu.memory_space<vmem>>, vector<300x4xbf16>
    %c0_3 = arith.constant 0 : index
    %c0_4 = arith.constant 0 : index
    %2 = vector.load %arg3[%c0_3, %c0_4] : memref<1x4xf32, #tpu.memory_space<vmem>>, vector<1x4xf32>
    %cst = arith.constant dense<0.000000e+00> : vector<48x4xf32>
    %3 = tpu.matmul %0, %1, %cst {dimension_numbers = #tpu.dot_dimension_numbers<[1], [0], [0], [1], [0, 0, 1, 1], [], []>} : vector<48x300xbf16>, vector<300x4xbf16>, vector<48x4xf32> -> vector<48x4xf32>
    %4 = vector.broadcast %2 : vector<1x4xf32> to vector<48x4xf32>
    %5 = arith.addf %3, %4 : vector<48x4xf32>
    %cst_5 = arith.constant dense<0xFF800000> : vector<48xf32>
    %6 = vector.multi_reduction <maximumf>, %5, %cst_5 [1] : vector<48x4xf32> to vector<48xf32>
    %7 = vector.shape_cast %6 : vector<48xf32> to vector<48x1xf32>
    %8 = vector.broadcast %7 : vector<48x1xf32> to vector<48x4xf32>
    %9 = arith.subf %5, %8 : vector<48x4xf32>
    %10 = math.exp %9 : vector<48x4xf32>
    %cst_6 = arith.constant dense<0.000000e+00> : vector<48xf32>
    %11 = vector.multi_reduction <add>, %10, %cst_6 [1] : vector<48x4xf32> to vector<48xf32>
    %12 = vector.shape_cast %11 : vector<48xf32> to vector<48x1xf32>
    %13 = vector.broadcast %12 : vector<48x1xf32> to vector<48x4xf32>
    %14 = arith.divf %10, %13 : vector<48x4xf32>
    %c0_7 = arith.constant 0 : index
    %c0_8 = arith.constant 0 : index
    %15 = vector.load %arg4[%c0_7, %c0_8] : memref<48x4xf32, #tpu.memory_space<vmem>>, vector<48x4xf32>
    tpu.vector_store %arg4[%c0_7, %c0_8], %14 {strides = array<i32>} : memref<48x4xf32, #tpu.memory_space<vmem>>, vector<48x4xf32>,
    return
  }
  func.func @transform_0(%arg0: i32) -> (i32, i32) {
    %c0_i32 = arith.constant 0 : i32
    %c0_i32_0 = arith.constant 0 : i32
    return %arg0, %c0_i32 : i32, i32
  }
  func.func @transform_1(%arg0: i32) -> (i32, i32) {
    %c0_i32 = arith.constant 0 : i32
    %c0_i32_0 = arith.constant 0 : i32
    %c0_i32_1 = arith.constant 0 : i32
    return %c0_i32, %c0_i32_0 : i32, i32
  }
  func.func @transform_2(%arg0: i32) -> (i32, i32) {
    %c0_i32 = arith.constant 0 : i32
    %c0_i32_0 = arith.constant 0 : i32
    %c0_i32_1 = arith.constant 0 : i32
    return %c0_i32, %c0_i32_0 : i32, i32
  }
  func.func @transform_3(%arg0: i32) -> (i32, i32) {
    %c0_i32 = arith.constant 0 : i32
    %c0_i32_0 = arith.constant 0 : i32
    return %arg0, %c0_i32 : i32, i32
  }
}

</mosaic_0001>

<llo_original>
// kernel: tpu_custom_call.1
$region0: #{tpu_custom_call.1}
  #allocation0 [shape = 'u32[]', space=smem, size = 0x4, offset = 0x4, fixed_abs, tag = 'smem constant byte address 0x4 - core index']
  #allocation1 [shape = 'u32[144,128]{1,0:T(1,128)}', space=vmem, size = 0x12000, scoped, tag = 'internal scratch']
  %s0 = inlined_call_operand.vmem [shape: bf16[70,300], index: 0, kind: input, shape index: {}]
  %s1 = inlined_call_operand.vmem [shape: bf16[300,4], index: 1, kind: input, shape index: {}]
  %s2 = inlined_call_operand.vmem [shape: f32[1,4], index: 2, kind: input, shape index: {}]
  %s3 = inlined_call_operand.vmem [shape: f32[70,4], index: 3, kind: output, shape index: {}]
  %s4 = sld [smem:[#allocation0]]
  $region93: #{tpu_custom_call.1} parent=0
    _
  %s6 = ssub.s32 1, %s4
  %s7 = scalar_select 0, %s6, %s4
  $region1: #{tpu_custom_call.1} parent=0
    #allocation2 [shape = 'u8[49152]{0}', space=vmem, size = 0xc000, scoped, tag = 'output window, operand 0']
    loop: start=0, step=1, limit=4
    $region2: #{tpu_custom_call.1} parent=1 // loop_pre_header
      _
    $region3: #{tpu_custom_call.1} parent=1 // loop_header
      %s9 = sphi 0, %s13
      %p10 = scmp.ge.s32.totalorder %s9, 4
      %s19 = sphi 0, %s21
      %s22 = sphi 0, %s19
      %s23 = sphi 0, %s22
      %s39 = sphi 0, %s23
      %s43 = sphi 0, %s43
      %s45 = sphi 0, %s43
      %s46 = sphi 0, %s45
      %s60 = sphi 0, %s46
      %s64 = sphi 0, %s64
      %s66 = sphi 0, %s64
      %s67 = sphi 0, %s66
      %s81 = sphi 0, %s67
      %s87 = sphi 0, %s89
      %s90 = sphi 0, %s87
      %s91 = sphi 0, %s90
      %s107 = sphi 0, %s91
    $region4: #{tpu_custom_call.1} parent=1 // loop_header_branch
      %12 = sbr.rel (%p10) target = $region8
    $region5: #{tpu_custom_call.1} parent=1 // loop_body
      %s14 = ssub.s32 %s9, 1
      %s15 = ssub.s32 %s9, 2
      %s16 = sadd.s32 %s9, 1
      %s17 = ssub.s32 %s9, %s16
      %p18 = scmp.eq.s32.totalorder %s17, 0
      %s20 = sadd.s32 %s19, 1
      %s21 = scalar_select %p18, %s19, %s20
      %p24 = pneg %p18
      %p25 = scmp.eq.s32.totalorder %s9, 1
      %p26 = por %p24, %p25
      %p27 = scmp.ne.s32.totalorder %s19, %s22
      %p28 = scmp.eq.s32.totalorder %s9, 0
      %p29 = por %p27, %p28
      %p30 = scmp.ne.s32.totalorder %s19, %s22
      %p31 = scmp.eq.s32.totalorder %s14, 1
      %p32 = por %p30, %p31
      %p33 = scmp.ne.s32.totalorder %s22, %s23
      %p34 = scmp.eq.s32.totalorder %s14, 0
      %p35 = por %p33, %p34
      %p36 = scmp.ne.s32.totalorder %s22, %s23
      %p37 = scmp.eq.s32.totalorder %s15, 1
      %p38 = por %p36, %p37
      %p40 = scmp.ne.s32.totalorder %s23, %s39
      %p41 = scmp.eq.s32.totalorder %s15, 0
      %p42 = por %p40, %p41
      %s44 = sadd.s32 %s43, 1
      %p47 = scmp.eq.s32.totalorder %s9, 1
      %p48 = scmp.ne.s32.totalorder %s43, %s45
      %p49 = scmp.eq.s32.totalorder %s9, 0
      %p50 = por %p48, %p49
      %p51 = scmp.ne.s32.totalorder %s43, %s45
      %p52 = scmp.eq.s32.totalorder %s14, 1
      %p53 = por %p51, %p52
      %p54 = scmp.ne.s32.totalorder %s45, %s46
      %p55 = scmp.eq.s32.totalorder %s14, 0
      %p56 = por %p54, %p55
      %p57 = scmp.ne.s32.totalorder %s45, %s46
      %p58 = scmp.eq.s32.totalorder %s15, 1
      %p59 = por %p57, %p58
      %p61 = scmp.ne.s32.totalorder %s46, %s60
      %p62 = scmp.eq.s32.totalorder %s15, 0
      %p63 = por %p61, %p62
      %s65 = sadd.s32 %s64, 1
      %p68 = scmp.eq.s32.totalorder %s9, 1
      %p69 = scmp.ne.s32.totalorder %s64, %s66
      %p70 = scmp.eq.s32.totalorder %s9, 0
      %p71 = por %p69, %p70
      %p72 = scmp.ne.s32.totalorder %s64, %s66
      %p73 = scmp.eq.s32.totalorder %s14, 1
      %p74 = por %p72, %p73
      %p75 = scmp.ne.s32.totalorder %s66, %s67
      %p76 = scmp.eq.s32.totalorder %s14, 0
      %p77 = por %p75, %p76
      %p78 = scmp.ne.s32.totalorder %s66, %s67
      %p79 = scmp.eq.s32.totalorder %s15, 1
      %p80 = por %p78, %p79
      %p82 = scmp.ne.s32.totalorder %s67, %s81
      %p83 = scmp.eq.s32.totalorder %s15, 0
      %p84 = por %p82, %p83
      %s85 = ssub.s32 %s9, %s16
      %p86 = scmp.eq.s32.totalorder %s85, 0
      %s88 = sadd.s32 %s87, 1
      %s89 = scalar_select %p86, %s87, %s88
      %p92 = pneg %p86
      %p93 = scmp.eq.s32.totalorder %s9, 1
      %p94 = por %p92, %p93
      %p95 = scmp.ne.s32.totalorder %s87, %s90
      %p96 = scmp.eq.s32.totalorder %s9, 0
      %p97 = por %p95, %p96
      %p98 = scmp.ne.s32.totalorder %s87, %s90
      %p99 = scmp.eq.s32.totalorder %s14, 1
      %p100 = por %p98, %p99
      %p101 = scmp.ne.s32.totalorder %s90, %s91
      %p102 = scmp.eq.s32.totalorder %s14, 0
      %p103 = por %p101, %p102
      %p104 = scmp.ne.s32.totalorder %s90, %s91
      %p105 = scmp.eq.s32.totalorder %s15, 1
      %p106 = por %p104, %p105
      %p108 = scmp.ne.s32.totalorder %s91, %s107
      %p109 = scmp.eq.s32.totalorder %s15, 0
      %p110 = por %p108, %p109
      %p111 = scmp.le.s32.totalorder 1, %s9
      %p112 = scmp.lt.s32.totalorder %s9, 3
      %p113 = pnand %p111, %p112
      %p114 = pneg %p113
      // Predicated region
      $region9: #{tpu_custom_call.1} parent=5 // pred_check
        _
      $region10: #{tpu_custom_call.1} parent=5 // pred_check_branch
        %116 = sbr.rel (%p113) target = $region12
      $region11: #{tpu_custom_call.1} parent=5 // pred_region
        %s117 = ssub.s32 %s9, 1
        // Predicated region
        $region13: #{tpu_custom_call.1} parent=11 // pred_check
          %p118 = pneg %p56
        $region14: #{tpu_custom_call.1} parent=11 // pred_check_branch
          %120 = sbr.rel (%p118) target = $region16
        $region15: #{tpu_custom_call.1} parent=11 // pred_region
          _
        $region16: #{tpu_custom_call.1} parent=11 // pred_fallthru
          _
        // Predicated region
        $region17: #{tpu_custom_call.1} parent=11 // pred_check
          %p121 = pneg %p77
        $region18: #{tpu_custom_call.1} parent=11 // pred_check_branch
          %123 = sbr.rel (%p121) target = $region20
        $region19: #{tpu_custom_call.1} parent=11 // pred_region
          _
        $region20: #{tpu_custom_call.1} parent=11 // pred_fallthru
          _
      $region12: #{tpu_custom_call.1} parent=5 // pred_fallthru
        _
      %p124 = scmp.lt.s32.totalorder %s9, 2
      // Predicated region
      $region21: #{tpu_custom_call.1} parent=5 // pred_check
        %p125 = pneg %p124
      $region22: #{tpu_custom_call.1} parent=5 // pred_check_branch
        %127 = sbr.rel (%p125) target = $region24
      $region23: #{tpu_custom_call.1} parent=5 // pred_region
        // Predicated region
        $region25: #{tpu_custom_call.1} parent=23 // pred_check
          %p128 = pneg %p29
        $region26: #{tpu_custom_call.1} parent=23 // pred_check_branch
          %130 = sbr.rel (%p128) target = $region28
        $region27: #{tpu_custom_call.1} parent=23 // pred_region
          %s131 = smul.u32 6, %s9
          %s132 = ssub.s32 9, %s131
          %p133 = scmp.lt.s32.totalorder %s132, 6
          %s134 = scalar_select %p133, %s132, 6
          %s135 = smul.u32 64, %s134
          %s136 = smul.u32 %s135, 3
          %p137 = scmp.lt.s32.totalorder %s131, 8
          %s138 = scalar_select %p137, %s131, 8
          %s139 = smul.addr %s138, 3
          %s140 = smul.addr %s139, 4
          %s141 = scalar_lea.vmem %s0, %s140
          %s142 = smul.u32 6, %s9
          %s143 = ssub.s32 9, %s142
          %p144 = scmp.lt.s32.totalorder %s143, 6
          %s145 = scalar_select %p144, %s143, 6
          %s146 = smul.u32 64, %s145
          %s147 = smul.u32 %s146, 3
        $region28: #{tpu_custom_call.1} parent=23 // pred_fallthru
          _
      $region24: #{tpu_custom_call.1} parent=5 // pred_fallthru
        _
      %p148 = scmp.le.s32.totalorder 1, %s9
      %p149 = scmp.lt.s32.totalorder %s9, 3
      %p150 = pnand %p148, %p149
      %p151 = pneg %p150
      // Predicated region
      $region29: #{tpu_custom_call.1} parent=5 // pred_check
        _
      $region30: #{tpu_custom_call.1} parent=5 // pred_check_branch
        %153 = sbr.rel (%p150) target = $region32
      $region31: #{tpu_custom_call.1} parent=5 // pred_region
        %s154 = ssub.s32 %s9, 1
        %s155 = smul.u32 6, %s14
        %s156 = ssub.s32 9, %s155
        %p157 = scmp.lt.s32.totalorder %s156, 6
        %s158 = scalar_select %p157, %s156, 6
        %s159 = smul.u32 64, %s158
        %s160 = smul.u32 %s159, 3
        %p161 = scmp.lt.s32.totalorder %s155, 8
        %s162 = scalar_select %p161, %s155, 8
        %s163 = smul.addr %s162, 3
        %s164 = smul.addr %s163, 4
        %s165 = scalar_lea.vmem %s0, %s164
        %p166 = pneg %p35
        %p167 = pneg %p32
        %p168 = pneg %p56
        %p169 = pneg %p53
        %p170 = pneg %p77
        %p171 = pneg %p74
        %p172 = pneg %p103
        %p173 = pneg %p100
        %s174 = sand.u32 %s90, 1
        %s175 = sand.u32 %s90, 1
        %s176 = smul.addr %s175, 48
        %s177 = scalar_lea.vmem [#allocation2], %s176
        %s178 = smul.u32 6, %s14
        %s179 = ssub.s32 9, %s178
        %p180 = scmp.lt.s32.totalorder %s179, 6
        %s181 = scalar_select %p180, %s179, 6
        %s182 = smul.u32 64, %s181
        %s183 = smul.u32 %s182, 3
        %p184 = scmp.lt.s32.totalorder %s178, 8
        %s185 = scalar_select %p184, %s178, 8
        %s186 = smul.addr %s185, 3
        %s187 = smul.addr %s186, 4
        %s188 = scalar_lea.vmem %s0, %s187
        %s189 = smul.u32 6, %s14
        %s190 = ssub.s32 9, %s189
        %p191 = scmp.lt.s32.totalorder %s190, 6
        %s192 = scalar_select %p191, %s190, 6
        %s193 = smul.u32 64, %s192
        %s194 = smul.u32 %s193, 3
        %s195 = smul.u32 6, %s14
        %s196 = ssub.s32 9, %s195
        %p197 = scmp.lt.s32.totalorder %s196, 6
        %s198 = scalar_select %p197, %s196, 6
        %s199 = smul.u32 128, %s198
        %v201 = vld [vmem:[%s188] sm:$0xff]
        %v202 = vld [vmem:[%s188 + $0x8] sm:$0xf]
        %v203 = vld [vmem:[%s188 + $0xc] sm:$0xff]
        %v204 = vld [vmem:[%s188 + $0x14] sm:$0xf]
        %v205 = vld [vmem:[%s188 + $0x18] sm:$0xff]
        %v206 = vld [vmem:[%s188 + $0x20] sm:$0xf]
        %v207 = vld [vmem:[%s188 + $0x24] sm:$0xff]
        %v208 = vld [vmem:[%s188 + $0x2c] sm:$0xf]
        %v209 = vld [vmem:[%s188 + $0x30] sm:$0xff]
        %v210 = vld [vmem:[%s188 + $0x38] sm:$0xf]
        %v211 = vld [vmem:[%s188 + $0x3c] sm:$0xff]
        %v212 = vld [vmem:[%s188 + $0x44] sm:$0xf]
        %v213 = vld [vmem:[%s1] sm:$0xf]
        %v214 = vld [vmem:[%s1 + $0x4] sm:$0xf]
        %v215 = vld [vmem:[%s1 + $0x8] sm:$0xf]
        %v216 = vld [vmem:[%s1 + $0xc] sm:$0xf]
        %v217 = vld [vmem:[%s1 + $0x10] sm:$0xf]
        %v218 = vld [vmem:[%s1 + $0x14] sm:$0xf]
        %v219 = vld [vmem:[%s1 + $0x18] sm:$0xf]
        %v220 = vld [vmem:[%s1 + $0x1c] sm:$0xf]
        %v221 = vld [vmem:[%s1 + $0x20] sm:$0xf]
        %v222 = vld [vmem:[%s1 + $0x24] sm:$0xf]
        %v223 = vld [vmem:[%s1 + $0x28] sm:$0xf]
        %v224 = vld [vmem:[%s1 + $0x2c] sm:$0xf]
        %v225 = vld [vmem:[%s1 + $0x30] sm:$0xf]
        %v226 = vld [vmem:[%s1 + $0x34] sm:$0xf]
        %v227 = vld [vmem:[%s1 + $0x38] sm:$0xf]
        %v228 = vld [vmem:[%s1 + $0x3c] sm:$0xf]
        %v229 = vld [vmem:[%s1 + $0x40] sm:$0xf]
        %v230 = vld [vmem:[%s1 + $0x44] sm:$0xf]
        %v231 = vld [vmem:[%s1 + $0x48] sm:$0xf]
        %v232 = vld [vmem:[%s1 + $0x4c] sm:$0xf]
        %v233 = vld [vmem:[%s1 + $0x50] sm:$0xf]
        %v234 = vld [vmem:[%s1 + $0x54] sm:$0xf]
        %v235 = vld [vmem:[%s1 + $0x58] sm:$0xf]
        %v236 = vld [vmem:[%s1 + $0x5c] sm:$0xf]
        %v237 = vld [vmem:[%s1 + $0x60] sm:$0xf]
        %v238 = vld [vmem:[%s1 + $0x64] sm:$0xf]
        %v239 = vld [vmem:[%s1 + $0x68] sm:$0xf]
        %v240 = vld [vmem:[%s1 + $0x6c] sm:$0xf]
        %v241 = vld [vmem:[%s1 + $0x70] sm:$0xf]
        %v242 = vld [vmem:[%s1 + $0x74] sm:$0xf]
        %v243 = vld [vmem:[%s1 + $0x78] sm:$0xf]
        %v244 = vld [vmem:[%s1 + $0x7c] sm:$0xf]
        %v245 = vld [vmem:[%s1 + $0x80] sm:$0xf]
        %v246 = vld [vmem:[%s1 + $0x84] sm:$0xf]
        %v247 = vld [vmem:[%s1 + $0x88] sm:$0xf]
        %v248 = vld [vmem:[%s1 + $0x8c] sm:$0xf]
        %v249 = vld [vmem:[%s1 + $0x90] sm:$0xf]
        %v250 = vld [vmem:[%s1 + $0x94] sm:$0x3]
        %v251 = vld [vmem:[%s2] sm:$0x1]
        %v253 = vlaneseq
        %v254 = vshrl.u32 %v253, 7
        %v255 = vsub.s32 0, %v254
        %v256 = vrot.slane %v251, %v255
        %v270 = vunpack.c.l.b16 %v201
        %v271 = vunpack.c.h.b16 %v201
        %v272 = vunpack.c.l.b16 %v202
        %v273 = vunpack.c.l.b16 %v203
        %v274 = vunpack.c.h.b16 %v203
        %v275 = vunpack.c.l.b16 %v204
        %v276 = vunpack.c.l.b16 %v205
        %v277 = vunpack.c.h.b16 %v205
        %v278 = vunpack.c.l.b16 %v206
        %v279 = vunpack.c.l.b16 %v207
        %v280 = vunpack.c.h.b16 %v207
        %v281 = vunpack.c.l.b16 %v208
        %v282 = vunpack.c.l.b16 %v209
        %v283 = vunpack.c.h.b16 %v209
        %v284 = vunpack.c.l.b16 %v210
        %v285 = vunpack.c.l.b16 %v211
        %v286 = vunpack.c.h.b16 %v211
        %v287 = vunpack.c.l.b16 %v212
        %v288 = vpack.c.b16 %v273, %v270
        %v289 = vpack.c.b16 %v274, %v271
        %v290 = vpack.c.b16 %v275, %v272
        %v291 = vpack.c.b16 %v279, %v276
        %v292 = vpack.c.b16 %v280, %v277
        %v293 = vpack.c.b16 %v281, %v278
        %v294 = vpack.c.b16 %v285, %v282
        %v295 = vpack.c.b16 %v286, %v283
        %v296 = vpack.c.b16 %v287, %v284
        %v341 = vunpack.c.l.b16 %v213
        %v342 = vunpack.c.l.b16 %v214
        %v343 = vunpack.c.l.b16 %v215
        %v344 = vunpack.c.l.b16 %v216
        %v345 = vunpack.c.l.b16 %v217
        %v346 = vunpack.c.l.b16 %v218
        %v347 = vunpack.c.l.b16 %v219
        %v348 = vunpack.c.l.b16 %v220
        %v349 = vunpack.c.l.b16 %v221
        %v350 = vunpack.c.l.b16 %v222
        %v351 = vunpack.c.l.b16 %v223
        %v352 = vunpack.c.l.b16 %v224
        %v353 = vunpack.c.l.b16 %v225
        %v354 = vunpack.c.l.b16 %v226
        %v355 = vunpack.c.l.b16 %v227
        %v356 = vunpack.c.l.b16 %v228
        %v357 = vunpack.c.l.b16 %v229
        %v358 = vunpack.c.l.b16 %v230
        %v359 = vunpack.c.l.b16 %v231
        %v360 = vunpack.c.l.b16 %v232
        %v361 = vunpack.c.l.b16 %v233
        %v362 = vunpack.c.l.b16 %v234
        %v363 = vunpack.c.l.b16 %v235
        %v364 = vunpack.c.l.b16 %v236
        %v365 = vunpack.c.l.b16 %v237
        %v366 = vunpack.c.l.b16 %v238
        %v367 = vunpack.c.l.b16 %v239
        %v368 = vunpack.c.l.b16 %v240
        %v369 = vunpack.c.l.b16 %v241
        %v370 = vunpack.c.l.b16 %v242
        %v371 = vunpack.c.l.b16 %v243
        %v372 = vunpack.c.l.b16 %v244
        %v373 = vunpack.c.l.b16 %v245
        %v374 = vunpack.c.l.b16 %v246
        %v375 = vunpack.c.l.b16 %v247
        %v376 = vunpack.c.l.b16 %v248
        %v377 = vunpack.c.l.b16 %v249
        %v378 = vunpack.c.l.b16 %v250
        %v379 = vpack.c.b16 %v342, %v341
        %v380 = vpack.c.b16 %v344, %v343
        %v381 = vpack.c.b16 %v346, %v345
        %v382 = vpack.c.b16 %v348, %v347
        %v383 = vpack.c.b16 %v350, %v349
        %v384 = vpack.c.b16 %v352, %v351
        %v385 = vpack.c.b16 %v354, %v353
        %v386 = vpack.c.b16 %v356, %v355
        %v387 = vpack.c.b16 %v358, %v357
        %v388 = vpack.c.b16 %v360, %v359
        %v389 = vpack.c.b16 %v362, %v361
        %v390 = vpack.c.b16 %v364, %v363
        %v391 = vpack.c.b16 %v366, %v365
        %v392 = vpack.c.b16 %v368, %v367
        %v393 = vpack.c.b16 %v370, %v369
        %v394 = vpack.c.b16 %v372, %v371
        %v395 = vpack.c.b16 %v374, %v373
        %v396 = vpack.c.b16 %v376, %v375
        %v397 = vpack.c.b16 %v378, %v377
        %vm416 = vcmask 359424
        %v418 = vsel %vm416, %v290, 0
        %v421 = vsel %vm416, %v293, 0
        %v424 = vsel %vm416, %v296, 0
        %vm426 = vcmask 1045504
        %v428 = vsel %vm426, %v397, 0
        %430 = vmatprep.subr.bf16.mxu0 0
        %431 = vmatpush1.bf16.msra.mxu0 %v379
        %432 = vmatprep.subr.bf16.mxu0 0
        %433 = vmatpush1.bf16.msra.mxu0 %v380
        %434 = vmatprep.subr.bf16.mxu0 0
        %435 = vmatpush1.bf16.msra.mxu0 %v381
        %436 = vmatprep.subr.bf16.mxu0 0
        %437 = vmatpush1.bf16.msra.mxu0 %v382
        %438 = vmatprep.subr.bf16.mxu0 0
        %439 = vmatpush1.bf16.msra.mxu0 %v383
        %440 = vmatprep.subr.bf16.mxu0 0
        %441 = vmatpush1.bf16.msra.mxu0 %v384
        %442 = vmatprep.subr.bf16.mxu0 0
        %443 = vmatpush1.bf16.msra.mxu0 %v385
        %444 = vmatprep.subr.bf16.mxu0 0
        %445 = vmatpush1.bf16.msra.mxu0 %v386
        %446 = vmatprep.subr.bf16.mxu0 0
        %447 = vmatpush1.bf16.msra.mxu0 %v387
        %448 = vmatprep.subr.bf16.mxu0 0
        %449 = vmatpush1.bf16.msra.mxu0 %v388
        %450 = vmatprep.subr.bf16.mxu0 0
        %451 = vmatpush1.bf16.msra.mxu0 %v389
        %452 = vmatprep.subr.bf16.mxu0 0
        %453 = vmatpush1.bf16.msra.mxu0 %v390
        %454 = vmatprep.subr.bf16.mxu0 0
        %455 = vmatpush1.bf16.msra.mxu0 %v391
        %456 = vmatprep.subr.bf16.mxu0 0
        %457 = vmatpush1.bf16.msra.mxu0 %v392
        %458 = vmatprep.subr.bf16.mxu0 0
        %459 = vmatpush1.bf16.msra.mxu0 %v393
        %460 = vmatprep.subr.bf16.mxu0 0
        %461 = vmatpush1.bf16.msra.mxu0 %v394
        %462 = vmatprep.mubr.bf16.mxu0 %v289
        %463 = vmatmul.mubr.bf16.gmra.mrb[0].mxu0 %v288
        %v464 = vpop.f32.mrb[0].mxu0
        %v465 = vadd.f32 %v256, %v464
        %v466 = vpop.f32.mrb[0].mxu0
        %v467 = vpop.f32.mrb[0].mxu0
        %v468 = vadd.f32 %v256, %v467
        %v469 = vpop.f32.mrb[0].mxu0
        %470 = vmatprep.mubr.bf16.mxu0 %v292
        %471 = vmatmul.mubr.bf16.gmra.mrb[0].mxu0 %v291
        %v472 = vpop.f32.mrb[0].mxu0
        %v473 = vadd.f32 %v256, %v472
        %v474 = vpop.f32.mrb[0].mxu0
        %v475 = vpop.f32.mrb[0].mxu0
        %v476 = vadd.f32 %v256, %v475
        %v477 = vpop.f32.mrb[0].mxu0
        %478 = vmatprep.mubr.bf16.mxu0 %v295
        %479 = vmatmul.mubr.bf16.gmra.mrb[0].mxu0 %v294
        %v480 = vpop.f32.mrb[0].mxu0
        %v481 = vadd.f32 %v256, %v480
        %v482 = vpop.f32.mrb[0].mxu0
        %v483 = vpop.f32.mrb[0].mxu0
        %v484 = vadd.f32 %v256, %v483
        %v485 = vpop.f32.mrb[0].mxu0
        %486 = vdwg.mxu0
        %487 = vmatprep.subr.bf16.mxu0 0
        %488 = vmatpush1.bf16.msra.mxu0 %v395
        %489 = vmatprep.subr.bf16.mxu0 0
        %490 = vmatpush1.bf16.msra.mxu0 %v396
        %491 = vmatprep.subr.bf16.mxu0 0
        %492 = vmatpush1.bf16.msra.mxu0 %v428
        %493 = vmatprep.subr.bf16.mxu0 0
        %494 = vmatpush1.bf16.msra.mxu0 0
        %495 = vmatprep.subr.bf16.mxu0 0
        %496 = vmatpush1.bf16.msra.mxu0 0
        %497 = vmatprep.subr.bf16.mxu0 0
        %498 = vmatpush1.bf16.msra.mxu0 0
        %499 = vmatprep.subr.bf16.mxu0 0
        %500 = vmatpush1.bf16.msra.mxu0 0
        %501 = vmatprep.subr.bf16.mxu0 0
        %502 = vmatpush1.bf16.msra.mxu0 0
        %503 = vmatprep.subr.bf16.mxu0 0
        %504 = vmatpush1.bf16.msra.mxu0 0
        %505 = vmatprep.subr.bf16.mxu0 0
        %506 = vmatpush1.bf16.msra.mxu0 0
        %507 = vmatprep.subr.bf16.mxu0 0
        %508 = vmatpush1.bf16.msra.mxu0 0
        %509 = vmatprep.subr.bf16.mxu0 0
        %510 = vmatpush1.bf16.msra.mxu0 0
        %511 = vmatprep.subr.bf16.mxu0 0
        %512 = vmatpush1.bf16.msra.mxu0 0
        %513 = vmatprep.subr.bf16.mxu0 0
        %514 = vmatpush1.bf16.msra.mxu0 0
        %515 = vmatprep.subr.bf16.mxu0 0
        %516 = vmatpush1.bf16.msra.mxu0 0
        %517 = vmatprep.subr.bf16.mxu0 0
        %518 = vmatpush1.bf16.msra.mxu0 0
        %519 = vmatprep.mubr.bf16.mxu0 0
        %520 = vmatmul.mubr.bf16.gmra.mrb[0].mxu0 %v418
        %v521 = vpop.f32.mrb[0].mxu0
        %v522 = vadd.f32 %v465, %v521
        %v523 = vpop.f32.mrb[0].mxu0
        %v524 = vpop.f32.mrb[0].mxu0
        %v525 = vadd.f32 %v468, %v524
        %v526 = vpop.f32.mrb[0].mxu0
        %527 = vmatprep.mubr.bf16.mxu0 0
        %528 = vmatmul.mubr.bf16.gmra.mrb[0].mxu0 %v421
        %v529 = vpop.f32.mrb[0].mxu0
        %v530 = vadd.f32 %v473, %v529
        %v531 = vpop.f32.mrb[0].mxu0
        %v532 = vpop.f32.mrb[0].mxu0
        %v533 = vadd.f32 %v476, %v532
        %v534 = vpop.f32.mrb[0].mxu0
        %535 = vmatprep.mubr.bf16.mxu0 0
        %536 = vmatmul.mubr.bf16.gmra.mrb[0].mxu0 %v424
        %v537 = vpop.f32.mrb[0].mxu0
        %v538 = vadd.f32 %v481, %v537
        %v539 = vpop.f32.mrb[0].mxu0
        %v540 = vpop.f32.mrb[0].mxu0
        %v541 = vadd.f32 %v484, %v540
        %v542 = vpop.f32.mrb[0].mxu0
        %543 = vdwg.mxu0
        %vm544 = vcmask 31744
        %v545 = vsel %vm544, %v522, -inf
        %546 = vmax.xlane.f32.xlu0 %v545
        %v547 = vpop.xlane.xlu0 %546
        %v548 = vsel %vm544, %v525, -inf
        %549 = vmax.xlane.f32.xlu0 %v548
        %v550 = vpop.xlane.xlu0 %549
        %v551 = vsel %vm544, %v530, -inf
        %552 = vmax.xlane.f32.xlu0 %v551
        %v553 = vpop.xlane.xlu0 %552
        %v554 = vsel %vm544, %v533, -inf
        %555 = vmax.xlane.f32.xlu0 %v554
        %v556 = vpop.xlane.xlu0 %555
        %v557 = vsel %vm544, %v538, -inf
        %558 = vmax.xlane.f32.xlu0 %v557
        %v559 = vpop.xlane.xlu0 %558
        %v560 = vsel %vm544, %v541, -inf
        %561 = vmax.xlane.f32.xlu0 %v560
        %v562 = vpop.xlane.xlu0 %561
        %v563 = vsub.f32 %v522, %v547
        %v564 = vsub.f32 %v525, %v550
        %v565 = vsub.f32 %v530, %v553
        %v566 = vsub.f32 %v533, %v556
        %v567 = vsub.f32 %v538, %v559
        %v568 = vsub.f32 %v541, %v562
        %v569 = vmul.f32 %v563, 1.442695
        %v570 = vpow.pop %v569
        %v571 = vmul.f32 %v564, 1.442695
        %v572 = vpow.pop %v571
        %v573 = vmul.f32 %v565, 1.442695
        %v574 = vpow.pop %v573
        %v575 = vmul.f32 %v566, 1.442695
        %v576 = vpow.pop %v575
        %v577 = vmul.f32 %v567, 1.442695
        %v578 = vpow.pop %v577
        %v579 = vmul.f32 %v568, 1.442695
        %v580 = vpow.pop %v579
        %v581 = vsel %vm544, %v570, 0.0
        %582 = vadd.xlane.f32.xlu0 %v581
        %v583 = vpop.xlane.xlu0 %582
        %v584 = vsel %vm544, %v572, 0.0
        %585 = vadd.xlane.f32.xlu0 %v584
        %v586 = vpop.xlane.xlu0 %585
        %v587 = vsel %vm544, %v574, 0.0
        %588 = vadd.xlane.f32.xlu0 %v587
        %v589 = vpop.xlane.xlu0 %588
        %v590 = vsel %vm544, %v576, 0.0
        %591 = vadd.xlane.f32.xlu0 %v590
        %v592 = vpop.xlane.xlu0 %591
        %v593 = vsel %vm544, %v578, 0.0
        %594 = vadd.xlane.f32.xlu0 %v593
        %v595 = vpop.xlane.xlu0 %594
        %v596 = vsel %vm544, %v580, 0.0
        %597 = vadd.xlane.f32.xlu0 %v596
        %v598 = vpop.xlane.xlu0 %597
        %v599 = vrcp.pop %v583
        %v600 = vmul.f32 %v570, %v599
        %v601 = vrcp.pop %v586
        %v602 = vmul.f32 %v572, %v601
        %v603 = vrcp.pop %v589
        %v604 = vmul.f32 %v574, %v603
        %v605 = vrcp.pop %v592
        %v606 = vmul.f32 %v576, %v605
        %v607 = vrcp.pop %v595
        %v608 = vmul.f32 %v578, %v607
        %v609 = vrcp.pop %v598
        %v610 = vmul.f32 %v580, %v609
        %611 = vst.msk [vmem:[%s177] sm:$0xff] %vm544, %v600
        %612 = vst.msk [vmem:[%s177 + $0x8] sm:$0xff] %vm544, %v602
        %613 = vst.msk [vmem:[%s177 + $0x10] sm:$0xff] %vm544, %v604
        %614 = vst.msk [vmem:[%s177 + $0x18] sm:$0xff] %vm544, %v606
        %615 = vst.msk [vmem:[%s177 + $0x20] sm:$0xff] %vm544, %v608
        %616 = vst.msk [vmem:[%s177 + $0x28] sm:$0xff] %vm544, %v610
        %s617 = sand.u32 %s90, 1
        %s618 = sand.u32 %s90, 1
        %s619 = smul.addr %s618, 48
        %s620 = scalar_lea.vmem [#allocation2], %s619
        // Predicated region
        $region33: #{tpu_custom_call.1} parent=31 // pred_check
          %p621 = pneg %p100
        $region34: #{tpu_custom_call.1} parent=31 // pred_check_branch
          %623 = sbr.rel (%p621) target = $region36
        $region35: #{tpu_custom_call.1} parent=31 // pred_region
          %s624 = smul.u32 6, %s14
          %s625 = ssub.s32 9, %s624
          %p626 = scmp.lt.s32.totalorder %s625, 6
          %s627 = scalar_select %p626, %s625, 6
          %s628 = smul.u32 128, %s627
          %p629 = scmp.ne.s32.totalorder 0, %s628
          %s630 = smul.addr %s624, 8
          %s631 = scalar_lea.vmem %s3, %s630
          // Predicated region
          $region37: #{tpu_custom_call.1} parent=35 // pred_check
            %p632 = pneg %p629
          $region38: #{tpu_custom_call.1} parent=35 // pred_check_branch
            %634 = sbr.rel (%p632) target = $region40
          $region39: #{tpu_custom_call.1} parent=35 // pred_region
            // Predicated region
            $region41: #{tpu_custom_call.1} parent=39 // pred_check
              _
            $region42: #{tpu_custom_call.1} parent=39 // pred_check_branch
              %636 = sbr.rel (0) target = $region44
            $region43: #{tpu_custom_call.1} parent=39 // pred_region
              // Predicated region
              $region63: #{tpu_custom_call.1} parent=43 // pred_check
                _
              $region64: #{tpu_custom_call.1} parent=43 // pred_check_branch
                %696 = sbr.rel (0) target = $region66
              $region65: #{tpu_custom_call.1} parent=43 // pred_region
                %s697 = sdiv.u32.pop %s627, 6
                %s698 = srem.u32.pop %s627, 6
                // While loop
                $region67: #{tpu_custom_call.1} parent=65 // loop_pre_header
                  _
                $region68: #{tpu_custom_call.1} parent=65 // loop_header
                  %s700 = sphi 0, %s702
                  %p701 = scmp.ge.s32.totalorder %s700, %s697
                  %s705 = sphi 0, %s722
                  %s706 = sphi %s620, %s725
                  %s707 = sphi %s631, %s726
                $region69: #{tpu_custom_call.1} parent=65 // loop_header_branch
                  %704 = sbr.rel (%p701) target = $region73
                $region70: #{tpu_custom_call.1} parent=65 // loop_body
                  %v708 = vld [vmem:[%s706] sm:$0xff]
                  %709 = vst [vmem:[%s707] sm:$0xff] %v708
                  %v710 = vld [vmem:[%s706 + $0x8] sm:$0xff]
                  %711 = vst [vmem:[%s707 + $0x8] sm:$0xff] %v710
                  %v712 = vld [vmem:[%s706 + $0x10] sm:$0xff]
                  %713 = vst [vmem:[%s707 + $0x10] sm:$0xff] %v712
                  %v714 = vld [vmem:[%s706 + $0x18] sm:$0xff]
                  %715 = vst [vmem:[%s707 + $0x18] sm:$0xff] %v714
                  %v716 = vld [vmem:[%s706 + $0x20] sm:$0xff]
                  %717 = vst [vmem:[%s707 + $0x20] sm:$0xff] %v716
                  %v718 = vld [vmem:[%s706 + $0x28] sm:$0xff]
                  %719 = vst [vmem:[%s707 + $0x28] sm:$0xff] %v718
                  %s720 = sadd.s32 1, %s705
                  %p721 = scmp.ge.s32.totalorder %s720, %s697
                  %s722 = scalar_select %p721, 0, %s720
                  %s723 = smul.u32 %s722, 48
                  %s724 = smul.u32 %s722, 48
                  %s725 = scalar_lea.vmem %s620, %s723 [#allocation2]
                  %s726 = scalar_lea.vmem %s631, %s724
                $region71: #{tpu_custom_call.1} parent=65 // loop_footer
                  %s702 = sadd.s32 %s700, 1
                $region72: #{tpu_custom_call.1} parent=65 // loop_footer_branch
                  %699 = sbr.rel target = $region68
                $region73: #{tpu_custom_call.1} parent=65 // loop_exit
                  _
                %s727 = sdiv.u32.pop %s627, 6
                %s728 = srem.u32.pop %s627, 6
                %s729 = smul.u32 %s727, 6
                %s730 = smul.u32 8, %s729
                %s731 = scalar_lea.vmem %s620, %s730 [#allocation2]
                %s732 = smul.u32 8, %s729
                %s733 = scalar_lea.vmem %s631, %s732
                // While loop
                $region74: #{tpu_custom_call.1} parent=65 // loop_pre_header
                  _
                $region75: #{tpu_custom_call.1} parent=65 // loop_header
                  %s735 = sphi 0, %s737
                  %p736 = scmp.ge.s32.totalorder %s735, %s728
                  %s740 = sphi 0, %s747
                  %s741 = sphi %s731, %s750
                  %s742 = sphi %s733, %s751
                $region76: #{tpu_custom_call.1} parent=65 // loop_header_branch
                  %739 = sbr.rel (%p736) target = $region80
                $region77: #{tpu_custom_call.1} parent=65 // loop_body
                  %v743 = vld [vmem:[%s741] sm:$0xff]
                  %744 = vst [vmem:[%s742] sm:$0xff] %v743
                  %s745 = sadd.s32 1, %s740
                  %p746 = scmp.ge.s32.totalorder %s745, %s728
                  %s747 = scalar_select %p746, 0, %s745
                  %s748 = smul.u32 %s747, 8
                  %s749 = smul.u32 %s747, 8
                  %s750 = scalar_lea.vmem %s731, %s748 [#allocation2]
                  %s751 = scalar_lea.vmem %s733, %s749
                $region78: #{tpu_custom_call.1} parent=65 // loop_footer
                  %s737 = sadd.s32 %s735, 1
                $region79: #{tpu_custom_call.1} parent=65 // loop_footer_branch
                  %734 = sbr.rel target = $region75
                $region80: #{tpu_custom_call.1} parent=65 // loop_exit
                  _
              $region66: #{tpu_custom_call.1} parent=43 // pred_fallthru
                _
              // Predicated region
              $region81: #{tpu_custom_call.1} parent=43 // pred_check
                _
              $region82: #{tpu_custom_call.1} parent=43 // pred_check_branch
                %753 = sbr.rel target = $region84
              $region83: #{tpu_custom_call.1} parent=43 // pred_region
                _
              $region84: #{tpu_custom_call.1} parent=43 // pred_fallthru
                _
            $region44: #{tpu_custom_call.1} parent=39 // pred_fallthru
              _
            // Predicated region
            $region45: #{tpu_custom_call.1} parent=39 // pred_check
              _
            $region46: #{tpu_custom_call.1} parent=39 // pred_check_branch
              %638 = sbr.rel target = $region48
            $region47: #{tpu_custom_call.1} parent=39 // pred_region
              %s640 = sdiv.u32.pop %s627, 6
              %s641 = srem.u32.pop %s627, 6
              // While loop
              $region49: #{tpu_custom_call.1} parent=47 // loop_pre_header
                _
              $region50: #{tpu_custom_call.1} parent=47 // loop_header
                %s643 = sphi 0, %s645
                %p644 = scmp.ge.s32.totalorder %s643, %s640
                %s648 = sphi 0, %s665
                %s649 = sphi %s620, %s668
                %s650 = sphi %s631, %s669
              $region51: #{tpu_custom_call.1} parent=47 // loop_header_branch
                %647 = sbr.rel (%p644) target = $region55
              $region52: #{tpu_custom_call.1} parent=47 // loop_body
                %v651 = vld [vmem:[%s649] sm:$0xff]
                %652 = vst [vmem:[%s650] sm:$0xff] %v651
                %v653 = vld [vmem:[%s649 + $0x8] sm:$0xff]
                %654 = vst [vmem:[%s650 + $0x8] sm:$0xff] %v653
                %v655 = vld [vmem:[%s649 + $0x10] sm:$0xff]
                %656 = vst [vmem:[%s650 + $0x10] sm:$0xff] %v655
                %v657 = vld [vmem:[%s649 + $0x18] sm:$0xff]
                %658 = vst [vmem:[%s650 + $0x18] sm:$0xff] %v657
                %v659 = vld [vmem:[%s649 + $0x20] sm:$0xff]
                %660 = vst [vmem:[%s650 + $0x20] sm:$0xff] %v659
                %v661 = vld [vmem:[%s649 + $0x28] sm:$0xff]
                %662 = vst [vmem:[%s650 + $0x28] sm:$0xff] %v661
                %s663 = sadd.s32 1, %s648
                %p664 = scmp.ge.s32.totalorder %s663, %s640
                %s665 = scalar_select %p664, 0, %s663
                %s666 = smul.u32 %s665, 48
                %s667 = smul.u32 %s665, 48
                %s668 = scalar_lea.vmem %s620, %s666 [#allocation2]
                %s669 = scalar_lea.vmem %s631, %s667
              $region53: #{tpu_custom_call.1} parent=47 // loop_footer
                %s645 = sadd.s32 %s643, 1
              $region54: #{tpu_custom_call.1} parent=47 // loop_footer_branch
                %642 = sbr.rel target = $region50
              $region55: #{tpu_custom_call.1} parent=47 // loop_exit
                _
              %s670 = sdiv.u32.pop %s627, 6
              %s671 = srem.u32.pop %s627, 6
              %s672 = smul.u32 %s670, 6
              %s673 = smul.u32 8, %s672
              %s674 = scalar_lea.vmem %s620, %s673 [#allocation2]
              %s675 = smul.u32 8, %s672
              %s676 = scalar_lea.vmem %s631, %s675
              // While loop
              $region56: #{tpu_custom_call.1} parent=47 // loop_pre_header
                _
              $region57: #{tpu_custom_call.1} parent=47 // loop_header
                %s678 = sphi 0, %s680
                %p679 = scmp.ge.s32.totalorder %s678, %s671
                %s683 = sphi 0, %s690
                %s684 = sphi %s674, %s693
                %s685 = sphi %s676, %s694
              $region58: #{tpu_custom_call.1} parent=47 // loop_header_branch
                %682 = sbr.rel (%p679) target = $region62
              $region59: #{tpu_custom_call.1} parent=47 // loop_body
                %v686 = vld [vmem:[%s684] sm:$0xff]
                %687 = vst [vmem:[%s685] sm:$0xff] %v686
                %s688 = sadd.s32 1, %s683
                %p689 = scmp.ge.s32.totalorder %s688, %s671
                %s690 = scalar_select %p689, 0, %s688
                %s691 = smul.u32 %s690, 8
                %s692 = smul.u32 %s690, 8
                %s693 = scalar_lea.vmem %s674, %s691 [#allocation2]
                %s694 = scalar_lea.vmem %s676, %s692
              $region60: #{tpu_custom_call.1} parent=47 // loop_footer
                %s680 = sadd.s32 %s678, 1
              $region61: #{tpu_custom_call.1} parent=47 // loop_footer_branch
                %677 = sbr.rel target = $region57
              $region62: #{tpu_custom_call.1} parent=47 // loop_exit
                _
            $region48: #{tpu_custom_call.1} parent=39 // pred_fallthru
              _
          $region40: #{tpu_custom_call.1} parent=35 // pred_fallthru
            _
          %754 = vnop
        $region36: #{tpu_custom_call.1} parent=31 // pred_fallthru
          _
      $region32: #{tpu_custom_call.1} parent=5 // pred_fallthru
        _
      %p755 = scmp.le.s32.totalorder 2, %s9
      // Predicated region
      $region85: #{tpu_custom_call.1} parent=5 // pred_check
        %p756 = pneg %p755
      $region86: #{tpu_custom_call.1} parent=5 // pred_check_branch
        %758 = sbr.rel (%p756) target = $region88
      $region87: #{tpu_custom_call.1} parent=5 // pred_region
        %s759 = ssub.s32 %s9, 2
        // Predicated region
        $region89: #{tpu_custom_call.1} parent=87 // pred_check
          %p760 = pneg %p106
        $region90: #{tpu_custom_call.1} parent=87 // pred_check_branch
          %762 = sbr.rel (%p760) target = $region92
        $region91: #{tpu_custom_call.1} parent=87 // pred_region
          %s763 = sand.u32 %s91, 1
          %s764 = sand.u32 %s91, 1
          %s765 = smul.addr %s764, 48
          %s766 = scalar_lea.vmem [#allocation2], %s765
        $region92: #{tpu_custom_call.1} parent=87 // pred_fallthru
          _
      $region88: #{tpu_custom_call.1} parent=5 // pred_fallthru
        _
    $region6: #{tpu_custom_call.1} parent=1 // loop_footer
      %s13 = sadd.s32 1, %s9
    $region7: #{tpu_custom_call.1} parent=1 // loop_footer_branch
      %8 = sbr.rel target = $region3
    $region8: #{tpu_custom_call.1} parent=1 // loop_exit
      _

</llo_original>
